<compile_context>
chip_gen: v7x
topology: tpu7x:2x2x1
jax: 0.10.0
libtpu: 0.0.40
codegen_flags: <defaults>
</compile_context>

<pallas_src>
import jax
import jax.numpy as jnp
from jax.experimental import pallas as pl
from jax.experimental.pallas import tpu as pltpu

NEG_LOGIT = -1e30   # finite "masked" logit for padded vocab columns (exp underflows to 0)


# ------------------------------ sizing helpers ------------------------------ #

def _round_up(x, m):
    return (x + m - 1) // m * m


def _vmem_budget_and_limit():
    """Generation-aware scoped-VMEM numbers.

    v7x has 64 MiB physical VMEM per TensorCore, v5e/v6e have 128 MiB.  Leave ~12 MiB of
    headroom for Mosaic internal scratch, cap at 112 MiB so v5e/v6e get large tiles while
    v7x stays inside its smaller budget.
    """
    phys = 64 * 2 ** 20                       # conservative default (v7x-sized)
    try:
        phys = int(pltpu.get_tpu_info().vmem_capacity_bytes)
    except Exception:
        pass
    limit = min(max(phys - 12 * 2 ** 20, 32 * 2 ** 20), 112 * 2 ** 20)
    budget = int(limit * 0.85)                # tile-picker headroom under the scoped limit
    return budget, limit


def _vmem_estimate(tr, hidden, tv, n_streams):
    """Per-grid-step working set; kept in sync with the kernel bodies below."""
    return (n_streams * 2 * tr * hidden * 2      # double-buffered bf16 hidden blocks
            + n_streams * 2 * hidden * tv * 2    # double-buffered bf16 weight vocab tiles
            + 2 * tv * 4                         # double-buffered f32 bias tile
            + 4 * n_streams * tr * tv * 4        # live f32 logits / exp temporaries
            + 2 * 8 * 128 * 4                    # partial-sum output block
            + 8 * tr * 4)                        # per-row f32 running softmax stats


def _pick_row_tile(n_rows):
    """Row tile: multiple of 16 (bf16 sublane packing), MXU-native 256 when rows are
    plentiful, and split into >= 2 tiles whenever rows allow so the 'parallel' row axis
    can feed both v7x TensorCores."""
    n16 = _round_up(max(n_rows, 1), 16)
    if n16 >= 512:
        return 256
    if n16 >= 32:
        return min(256, _round_up(n16 // 2, 16))
    return n16


def _pick_tiles(n_rows, hidden, vocab, n_streams, budget_bytes):
    """Pick (row_tile, vocab_tile): largest lane-aligned vocab tile (cap 2048) that fits
    the VMEM budget; shrink the row tile only as a last resort."""
    tr = _pick_row_tile(n_rows)
    v128 = _round_up(vocab, 128)
    while True:
        tv = min(2048, v128)
        while tv > 128 and _vmem_estimate(tr, hidden, tv, n_streams) > budget_bytes:
            tv -= 128
        if _vmem_estimate(tr, hidden, tv, n_streams) <= budget_bytes or tr <= 16:
            return tr, tv
        tr = max(16, _round_up(tr // 2, 16))


def _pad_rows(x, n_pad, fill=0):
    n = x.shape[0]
    if n == n_pad:
        return x
    pad_width = [(0, n_pad - n)] + [(0, 0)] * (x.ndim - 1)
    return jnp.pad(x, pad_width, constant_values=fill)


def _pad_cols(w, v_pad):
    v = w.shape[1]
    if v == v_pad:
        return w
    return jnp.pad(w, ((0, 0), (0, v_pad - v)))


def _vocab_bias(vocab, v_pad):
    """(1, v_pad) additive logit bias: 0 on real vocab columns, -1e30 on padding, so all
    vocab tiles stay lane-dense while padded columns contribute exactly 0 to softmax."""
    return jnp.where(jnp.arange(v_pad) < vocab, 0.0, NEG_LOGIT
                     ).astype(jnp.float32).reshape(1, v_pad)


# ------------------- fused KD: streamed projection + online KL -------------- #

def kd_fused_kernel(hs_ref, ws_ref, ht_ref, wt_ref, bias_ref, out_ref,
                    mt_ref, zt_ref, a_ref, b_ref, ms_ref, zs_ref):
    j = pl.program_id(1)

    @pl.when(j == 0)
    def _():
        mt_ref[...] = jnp.full(mt_ref.shape, -jnp.inf, jnp.float32)
        ms_ref[...] = jnp.full(ms_ref.shape, -jnp.inf, jnp.float32)
        zt_ref[...] = jnp.zeros(zt_ref.shape, jnp.float32)
        zs_ref[...] = jnp.zeros(zs_ref.shape, jnp.float32)
        a_ref[...] = jnp.zeros(a_ref.shape, jnp.float32)
        b_ref[...] = jnp.zeros(b_ref.shape, jnp.float32)

    bias = bias_ref[...]                                                     # (1, TV)
    # Streamed head projection for this (row tile, vocab tile): bf16 MXU, f32 accumulate.
    s = jnp.dot(hs_ref[...], ws_ref[...], preferred_element_type=jnp.float32) + bias
    t = jnp.dot(ht_ref[...], wt_ref[...], preferred_element_type=jnp.float32) + bias

    # Teacher online-softmax statistics (raw-logit weighted sums; rescale on max change).
    mt_old = mt_ref[...]
    mt_new = jnp.maximum(mt_old, jnp.max(t, axis=-1, keepdims=True))
    ct = jnp.exp(mt_old - mt_new)
    et = jnp.exp(t - mt_new)                                                 # (tr, TV)
    zt_ref[...] = ct * zt_ref[...] + jnp.sum(et, axis=-1, keepdims=True)
    a_ref[...] = ct * a_ref[...] + jnp.sum(et * t, axis=-1, keepdims=True)   # Σ e_t * t
    b_ref[...] = ct * b_ref[...] + jnp.sum(et * s, axis=-1, keepdims=True)   # Σ e_t * s
    mt_ref[...] = mt_new

    # Student online log-sum-exp.
    ms_old = ms_ref[...]
    ms_new = jnp.maximum(ms_old, jnp.max(s, axis=-1, keepdims=True))
    cs = jnp.exp(ms_old - ms_new)
    zs_ref[...] = cs * zs_ref[...] + jnp.sum(jnp.exp(s - ms_new), axis=-1, keepdims=True)
    ms_ref[...] = ms_new

    @pl.when(j == pl.num_programs(1) - 1)
    def _():
        # KL_row = (Σe_t·t − Σe_t·s)/Z_t − m_t + m_s − log Z_t + log Z_s
        # (exact per-row divide on a (tr,1) vector; padded rows give exactly 0).
        kl_row = ((a_ref[...] - b_ref[...]) / zt_ref[...]
                  - mt_ref[...] + ms_ref[...]
                  - jnp.log(zt_ref[...]) + jnp.log(zs_ref[...]))
        out_ref[...] = jnp.broadcast_to(jnp.sum(kl_row), out_ref.shape)


def kd_kl_loss_fused(h_student, w_student, h_teacher, w_teacher):
    """F.kl_div(log_softmax(Hs@Ws), log_softmax(Ht@Wt), 'batchmean', log_target=True)."""
    n_rows, hidden = h_student.shape
    vocab = w_student.shape[1]                      # == min_vocab columns for both heads
    budget, vmem_limit = _vmem_budget_and_limit()
    tr, tv = _pick_tiles(n_rows, hidden, vocab, n_streams=2, budget_bytes=budget)
    n_pad = _round_up(n_rows, tr)
    v_pad = _round_up(_round_up(vocab, 128), tv)
    grid = (n_pad // tr, v_pad // tv)

    # Zero-padded rows see identical student/teacher logits (bias only) -> exact 0 KL.
    hs = _pad_rows(h_student, n_pad).astype(jnp.bfloat16)
    ht = _pad_rows(h_teacher, n_pad).astype(jnp.bfloat16)
    ws = _pad_cols(w_student.astype(jnp.bfloat16), v_pad)
    wt = _pad_cols(w_teacher.astype(jnp.bfloat16), v_pad)
    bias = _vocab_bias(vocab, v_pad)

    # TODO(synk): on v5e, a deeper (3-buffer) pipeline on the streamed weight tiles and
    # an fp8 weight path on v7x would further hide the weight DMA; default 2-deep
    # pipelining is used here.
    partials = pl.pallas_call(
        kd_fused_kernel,
        out_shape=jax.ShapeDtypeStruct((grid[0], 8, 128), jnp.float32),
        grid_spec=pltpu.PrefetchScalarGridSpec(
            num_scalar_prefetch=0,
            grid=grid,
            in_specs=[pl.BlockSpec((tr, hidden), lambda i, j: (i, 0)),
                      pl.BlockSpec((hidden, tv), lambda i, j: (0, j)),   # streamed vocab tile
                      pl.BlockSpec((tr, hidden), lambda i, j: (i, 0)),
                      pl.BlockSpec((hidden, tv), lambda i, j: (0, j)),   # streamed vocab tile
                      pl.BlockSpec((1, tv), lambda i, j: (0, j))],       # vocab-pad bias
            out_specs=pl.BlockSpec((1, 8, 128), lambda i, j: (i, 0, 0)),
            scratch_shapes=[pltpu.VMEM((tr, 1), jnp.float32)] * 6),
        compiler_params=pltpu.CompilerParams(
            dimension_semantics=("parallel", "arbitrary"),
            vmem_limit_bytes=vmem_limit),
    )(hs, ws, ht, wt, bias)

    return jnp.sum(partials[:, 0, 0]) / jnp.float32(n_rows)   # batchmean


# ------------------- fused CE: streamed projection + online NLL ------------- #

def ce_fused_kernel(h_ref, w_ref, bias_ref, tgt_ref, out_ref,
                    m_ref, z_ref, pick_ref):
    j = pl.program_id(1)
    tv = w_ref.shape[1]

    @pl.when(j == 0)
    def _():
        m_ref[...] = jnp.full(m_ref.shape, -jnp.inf, jnp.float32)
        z_ref[...] = jnp.zeros(z_ref.shape, jnp.float32)
        pick_ref[...] = jnp.zeros(pick_ref.shape, jnp.float32)

    logits = (jnp.dot(h_ref[...], w_ref[...], preferred_element_type=jnp.float32)
              + bias_ref[...])                                               # (tr, TV)

    # Online log-sum-exp over the streamed vocab tiles.
    m_old = m_ref[...]
    m_new = jnp.maximum(m_old, jnp.max(logits, axis=-1, keepdims=True))
    c = jnp.exp(m_old - m_new)
    z_ref[...] = c * z_ref[...] + jnp.sum(jnp.exp(logits - m_new), axis=-1, keepdims=True)
    m_ref[...] = m_new

    # Gather the target column from the RAW (pre-normalization) logits of this tile.
    col = j * tv + jax.lax.broadcasted_iota(jnp.int32, logits.shape, 1)
    tgt = tgt_ref[...]                                                       # (tr, 1) int32
    pick_ref[...] += jnp.sum(jnp.where(col == tgt, logits, 0.0), axis=-1, keepdims=True)

    @pl.when(j == pl.num_programs(1) - 1)
    def _():
        valid = tgt_ref[...] != -100                       # padded rows carry -100
        loss_row = m_ref[...] + jnp.log(z_ref[...]) - pick_ref[...]
        loss_sum = jnp.sum(jnp.where(valid, loss_row, 0.0))
        count = jnp.sum(valid.astype(jnp.float32))
        slot = jax.lax.broadcasted_iota(jnp.int32, out_ref.shape, 1)
        out_ref[...] = jnp.where(slot == 0, loss_sum, jnp.where(slot == 1, count, 0.0))


def ce_loss_fused(h, w, targets):
    """Mean cross-entropy of softmax(h @ w) over targets != -100 (ignore_index)."""
    n_rows, hidden = h.shape
    vocab = w.shape[1]
    budget, vmem_limit = _vmem_budget_and_limit()
    tr, tv = _pick_tiles(n_rows, hidden, vocab, n_streams=1, budget_bytes=budget)
    n_pad = _round_up(n_rows, tr)
    v_pad = _round_up(_round_up(vocab, 128), tv)
    grid = (n_pad // tr, v_pad // tv)

    hp = _pad_rows(h, n_pad).astype(jnp.bfloat16)
    wp = _pad_cols(w.astype(jnp.bfloat16), v_pad)
    bias = _vocab_bias(vocab, v_pad)
    tgt = _pad_rows(targets.reshape(n_rows, 1).astype(jnp.int32), n_pad, fill=-100)

    partials = pl.pallas_call(
        ce_fused_kernel,
        out_shape=jax.ShapeDtypeStruct((grid[0], 8, 128), jnp.float32),
        grid_spec=pltpu.PrefetchScalarGridSpec(
            num_scalar_prefetch=0,
            grid=grid,
            in_specs=[pl.BlockSpec((tr, hidden), lambda i, j: (i, 0)),
                      pl.BlockSpec((hidden, tv), lambda i, j: (0, j)),   # streamed vocab tile
                      pl.BlockSpec((1, tv), lambda i, j: (0, j)),        # vocab-pad bias
                      pl.BlockSpec((tr, 1), lambda i, j: (i, 0))],       # targets
            out_specs=pl.BlockSpec((1, 8, 128), lambda i, j: (i, 0, 0)),
            scratch_shapes=[pltpu.VMEM((tr, 1), jnp.float32)] * 3),
        compiler_params=pltpu.CompilerParams(
            dimension_semantics=("parallel", "arbitrary"),
            vmem_limit_bytes=vmem_limit),
    )(hp, wp, bias, tgt)

    total = jnp.sum(partials[:, 0, 0])
    count = jnp.sum(partials[:, 1, 0])
    return total / jnp.maximum(count, 1.0)


# ------------------------- synthetic student / teacher ---------------------- #
# Embedding gathers & pooled encoder context are tiny and stay in plain JAX; the vocab
# projection itself is fused into the loss kernels above.

def student_hidden(params, encoder_input_ids, decoder_input_ids):
    enc_emb = params["E_s"][encoder_input_ids]               # (B, T_enc, H)
    enc_ctx = jnp.mean(enc_emb, axis=1, keepdims=True)       # (B, 1, H)
    dec_emb = params["E_s"][decoder_input_ids]               # (B, T_dec, H)
    return dec_emb + enc_ctx                                 # (B, T_dec, H)


def teacher_hidden(params, input_ids, attention_mask):
    return params["E_t"][input_ids] * attention_mask[..., None].astype(jnp.float32)


# ------------------------------ KDModel forward ------------------------------ #

def kd_model_forward(params, encoder_input_ids, decoder_input_ids,
                     kd_teacher_input_ids, kd_teacher_attention_mask,
                     kd_student_decoder_input_ids, targets,
                     alpha, encoder_seq_len, decoder_seq_len):
    hidden = params["E_s"].shape[1]

    # --- forward_kd: teacher time-window + min_vocab sliced BEFORE projection ---
    hs = student_hidden(params, encoder_input_ids, kd_student_decoder_input_ids)  # (B,Td,H)
    ht_full = jax.lax.stop_gradient(
        teacher_hidden(params, kd_teacher_input_ids, kd_teacher_attention_mask))
    ht = jax.lax.dynamic_slice_in_dim(
        ht_full, encoder_seq_len - 1, decoder_seq_len, axis=1)                    # (B,Td,H)

    min_v = min(params["W_s"].shape[1], params["W_t"].shape[1])
    n_rows = hs.shape[0] * hs.shape[1]
    kd_loss = kd_kl_loss_fused(hs.reshape(n_rows, hidden), params["W_s"][:, :min_v],
                               ht.reshape(n_rows, hidden), params["W_t"][:, :min_v])

    # --- student CE pass over the full student vocab ---
    hc = student_hidden(params, encoder_input_ids, decoder_input_ids)
    ce = ce_loss_fused(hc.reshape(-1, hidden), params["W_s"], targets.reshape(-1))

    loss = alpha * kd_loss + (1.0 - alpha) * ce
    return loss, kd_loss, ce

# TODO(synk): tokenizer-based `_log_sample` logging has no Pallas equivalent and is omitted.


# ---------------------------------- main ------------------------------------ #

if __name__ == "__main__":
    B = 2
    ENC_LEN = 8           # encoder_seq_len (small analogue of 4096)
    DEC_LEN = 8           # decoder_seq_len (small analogue of 256)
    T_TEACHER = 16        # >= ENC_LEN - 1 + DEC_LEN
    H = 32
    V_S = 128             # student vocab
    V_T = 256             # teacher vocab  -> min_vocab = 128
    ALPHA = 0.5

    key = jax.random.PRNGKey(0)
    k1, k2, k3, k4, k5, k6, k7, k8 = jax.random.split(key, 8)

    params = {
        "E_s": (jax.random.normal(k1, (V_S, H), jnp.float32) * 0.05),
        "W_s": (jax.random.normal(k2, (H, V_S), jnp.float32) * 0.05),
        "E_t": (jax.random.normal(k3, (V_T, H), jnp.float32) * 0.05),
        "W_t": (jax.random.normal(k4, (H, V_T), jnp.float32) * 0.05),
    }

    encoder_input_ids = jax.random.randint(k5, (B, ENC_LEN), 0, V_S, jnp.int32)
    decoder_input_ids = jax.random.randint(k6, (B, DEC_LEN), 0, V_S, jnp.int32)
    kd_student_decoder_input_ids = jax.random.randint(k7, (B, DEC_LEN), 0, V_S, jnp.int32)
    kd_teacher_input_ids = jax.random.randint(k8, (B, T_TEACHER), 0, V_T, jnp.int32)
    kd_teacher_attention_mask = jnp.ones((B, T_TEACHER), jnp.int32)
    targets = jax.random.randint(jax.random.fold_in(key, 99), (B, DEC_LEN), 0, V_S, jnp.int32)
    targets = targets.at[0, :2].set(-100)   # exercise ignore_index=-100

    loss, kd_loss, ce = kd_model_forward(
        params, encoder_input_ids, decoder_input_ids,
        kd_teacher_input_ids, kd_teacher_attention_mask,
        kd_student_decoder_input_ids, targets,
        ALPHA, ENC_LEN, DEC_LEN)
    jax.block_until_ready(loss)

    # ---- pure-JAX reference (same bf16-operand / f32-accumulate head matmul) ----
    def ref_forward():
        def proj(h, w):
            return jnp.einsum("bth,hv->btv",
                              h.astype(jnp.bfloat16), w.astype(jnp.bfloat16),
                              preferred_element_type=jnp.float32)

        def s_hidden(enc, dec):
            enc_ctx = jnp.mean(params["E_s"][enc], axis=1, keepdims=True)
            return params["E_s"][dec] + enc_ctx

        def t_hidden(ids, mask):
            return params["E_t"][ids] * mask[..., None].astype(jnp.float32)

        # Reference follows the PyTorch order: project full, then slice time / vocab.
        s_lg = proj(s_hidden(encoder_input_ids, kd_student_decoder_input_ids), params["W_s"])
        t_lg = proj(t_hidden(kd_teacher_input_ids, kd_teacher_attention_mask), params["W_t"])
        t_tgt = t_lg[:, ENC_LEN - 1:ENC_LEN - 1 + DEC_LEN, :]
        mv = min(s_lg.shape[-1], t_tgt.shape[-1])
        s_f = s_lg[..., :mv].reshape(-1, mv)
        t_f = t_tgt[..., :mv].reshape(-1, mv)
        s_ls = jax.nn.log_softmax(s_f, -1)
        t_ls = jax.nn.log_softmax(t_f, -1)
        kd = jnp.sum(jnp.exp(t_ls) * (t_ls - s_ls)) / s_f.shape[0]

        ce_lg = proj(s_hidden(encoder_input_ids, decoder_input_ids),
                     params["W_s"]).reshape(-1, V_S)
        tg = targets.reshape(-1)
        ls = jax.nn.log_softmax(ce_lg, -1)
        valid = tg != -100
        picked = jnp.take_along_axis(ls, jnp.clip(tg, 0)[:, None], axis=-1)[:, 0]
        ce_r = jnp.sum(jnp.where(valid, -picked, 0.0)) / jnp.maximum(jnp.sum(valid), 1)
        return ALPHA * kd + (1.0 - ALPHA) * ce_r, kd, ce_r

    ref_loss, ref_kd, ref_ce = ref_forward()
    assert jnp.allclose(ce, ref_ce, atol=1e-4, rtol=1e-3), (ce, ref_ce)
    assert jnp.allclose(kd_loss, ref_kd, atol=3e-4, rtol=2e-2), (kd_loss, ref_kd)
    assert jnp.allclose(loss, ref_loss, atol=3e-4, rtol=2e-2), (loss, ref_loss)

    print("KERNEL_OK")
</pallas_src>

<mosaic_0001>
module attributes {stable_mosaic.version = 11 : i64} {
  func.func @kd_fused_kernel(%arg0: i32, %arg1: i32, %arg2: memref<16x32xbf16, #tpu.memory_space<vmem>>, %arg3: memref<32x128xbf16, #tpu.memory_space<vmem>>, %arg4: memref<16x32xbf16, #tpu.memory_space<vmem>>, %arg5: memref<32x128xbf16, #tpu.memory_space<vmem>>, %arg6: memref<1x128xf32, #tpu.memory_space<vmem>>, %arg7: memref<1x8x128xf32, #tpu.memory_space<vmem>>, %arg8: memref<16x1xf32, #tpu.memory_space<vmem>>, %arg9: memref<16x1xf32, #tpu.memory_space<vmem>>, %arg10: memref<16x1xf32, #tpu.memory_space<vmem>>, %arg11: memref<16x1xf32, #tpu.memory_space<vmem>>, %arg12: memref<16x1xf32, #tpu.memory_space<vmem>>, %arg13: memref<16x1xf32, #tpu.memory_space<vmem>>) attributes {dimension_semantics = [#tpu.dimension_semantics<parallel>, #tpu.dimension_semantics<arbitrary>], iteration_bounds = array<i64: 1, 1>, scalar_prefetch = 0 : i64, scratch_operands = 6 : i64, tpu.core_type = #tpu.core_type<tc>, window_params = [{transform_indices = @transform_0, window_bounds = array<i64: 16, 32>}, {transform_indices = @transform_1, window_bounds = array<i64: 32, 128>}, {transform_indices = @transform_2, window_bounds = array<i64: 16, 32>}, {transform_indices = @transform_3, window_bounds = array<i64: 32, 128>}, {transform_indices = @transform_4, window_bounds = array<i64: 1, 128>}, {transform_indices = @transform_5, window_bounds = array<i64: 1, 8, 128>}]} {
    %c0_i32 = arith.constant 0 : i32
    %0 = arith.cmpi eq, %arg1, %c0_i32 : i32
    %1 = arith.extui %0 : i1 to i32
    %c0_i32_0 = arith.constant 0 : i32
    %2 = arith.cmpi ne, %1, %c0_i32_0 : i32
    scf.if %2 {
      %cst_43 = arith.constant 0xFF800000 : f32
      %63 = vector.broadcast %cst_43 : f32 to vector<16x1xf32>
      %c0_44 = arith.constant 0 : index
      %c0_45 = arith.constant 0 : index
      %64 = vector.load %arg8[%c0_44, %c0_45] : memref<16x1xf32, #tpu.memory_space<vmem>>, vector<16x1xf32>
      tpu.vector_store %arg8[%c0_44, %c0_45], %63 {strides = array<i32>} : memref<16x1xf32, #tpu.memory_space<vmem>>, vector<16x1xf32>,
      %cst_46 = arith.constant 0xFF800000 : f32
      %65 = vector.broadcast %cst_46 : f32 to vector<16x1xf32>
      %c0_47 = arith.constant 0 : index
      %c0_48 = arith.constant 0 : index
      %66 = vector.load %arg12[%c0_47, %c0_48] : memref<16x1xf32, #tpu.memory_space<vmem>>, vector<16x1xf32>
      tpu.vector_store %arg12[%c0_47, %c0_48], %65 {strides = array<i32>} : memref<16x1xf32, #tpu.memory_space<vmem>>, vector<16x1xf32>,
      %cst_49 = arith.constant 0.000000e+00 : f32
      %67 = vector.broadcast %cst_49 : f32 to vector<16x1xf32>
      %c0_50 = arith.constant 0 : index
      %c0_51 = arith.constant 0 : index
      %68 = vector.load %arg9[%c0_50, %c0_51] : memref<16x1xf32, #tpu.memory_space<vmem>>, vector<16x1xf32>
      tpu.vector_store %arg9[%c0_50, %c0_51], %67 {strides = array<i32>} : memref<16x1xf32, #tpu.memory_space<vmem>>, vector<16x1xf32>,
      %cst_52 = arith.constant 0.000000e+00 : f32
      %69 = vector.broadcast %cst_52 : f32 to vector<16x1xf32>
      %c0_53 = arith.constant 0 : index
      %c0_54 = arith.constant 0 : index
      %70 = vector.load %arg13[%c0_53, %c0_54] : memref<16x1xf32, #tpu.memory_space<vmem>>, vector<16x1xf32>
      tpu.vector_store %arg13[%c0_53, %c0_54], %69 {strides = array<i32>} : memref<16x1xf32, #tpu.memory_space<vmem>>, vector<16x1xf32>,
      %cst_55 = arith.constant 0.000000e+00 : f32
      %71 = vector.broadcast %cst_55 : f32 to vector<16x1xf32>
      %c0_56 = arith.constant 0 : index
      %c0_57 = arith.constant 0 : index
      %72 = vector.load %arg10[%c0_56, %c0_57] : memref<16x1xf32, #tpu.memory_space<vmem>>, vector<16x1xf32>
      tpu.vector_store %arg10[%c0_56, %c0_57], %71 {strides = array<i32>} : memref<16x1xf32, #tpu.memory_space<vmem>>, vector<16x1xf32>,
      %cst_58 = arith.constant 0.000000e+00 : f32
      %73 = vector.broadcast %cst_58 : f32 to vector<16x1xf32>
      %c0_59 = arith.constant 0 : index
      %c0_60 = arith.constant 0 : index
      %74 = vector.load %arg11[%c0_59, %c0_60] : memref<16x1xf32, #tpu.memory_space<vmem>>, vector<16x1xf32>
      tpu.vector_store %arg11[%c0_59, %c0_60], %73 {strides = array<i32>} : memref<16x1xf32, #tpu.memory_space<vmem>>, vector<16x1xf32>,
    } else {
    }
    %c0 = arith.constant 0 : index
    %c0_1 = arith.constant 0 : index
    %3 = vector.load %arg6[%c0, %c0_1] : memref<1x128xf32, #tpu.memory_space<vmem>>, vector<1x128xf32>
    %c0_2 = arith.constant 0 : index
    %c0_3 = arith.constant 0 : index
    %4 = vector.load %arg2[%c0_2, %c0_3] : memref<16x32xbf16, #tpu.memory_space<vmem>>, vector<16x32xbf16>
    %c0_4 = arith.constant 0 : index
    %c0_5 = arith.constant 0 : index
    %5 = vector.load %arg3[%c0_4, %c0_5] : memref<32x128xbf16, #tpu.memory_space<vmem>>, vector<32x128xbf16>
    %cst = arith.constant dense<0.000000e+00> : vector<16x128xf32>
    %6 = tpu.matmul %4, %5, %cst {dimension_numbers = #tpu.dot_dimension_numbers<[1], [0], [0], [1], [0, 0, 1, 1], [], []>} : vector<16x32xbf16>, vector<32x128xbf16>, vector<16x128xf32> -> vector<16x128xf32>
    %7 = vector.broadcast %3 : vector<1x128xf32> to vector<16x128xf32>
    %8 = arith.addf %6, %7 : vector<16x128xf32>
    %c0_6 = arith.constant 0 : index
    %c0_7 = arith.constant 0 : index
    %9 = vector.load %arg4[%c0_6, %c0_7] : memref<16x32xbf16, #tpu.memory_space<vmem>>, vector<16x32xbf16>
    %c0_8 = arith.constant 0 : index
    %c0_9 = arith.constant 0 : index
    %10 = vector.load %arg5[%c0_8, %c0_9] : memref<32x128xbf16, #tpu.memory_space<vmem>>, vector<32x128xbf16>
    %cst_10 = arith.constant dense<0.000000e+00> : vector<16x128xf32>
    %11 = tpu.matmul %9, %10, %cst_10 {dimension_numbers = #tpu.dot_dimension_numbers<[1], [0], [0], [1], [0, 0, 1, 1], [], []>} : vector<16x32xbf16>, vector<32x128xbf16>, vector<16x128xf32> -> vector<16x128xf32>
    %12 = vector.broadcast %3 : vector<1x128xf32> to vector<16x128xf32>
    %13 = arith.addf %11, %12 : vector<16x128xf32>
    %c0_11 = arith.constant 0 : index
    %c0_12 = arith.constant 0 : index
    %14 = vector.load %arg8[%c0_11, %c0_12] : memref<16x1xf32, #tpu.memory_space<vmem>>, vector<16x1xf32>
    %cst_13 = arith.constant dense<0xFF800000> : vector<16xf32>
    %15 = vector.multi_reduction <maximumf>, %13, %cst_13 [1] : vector<16x128xf32> to vector<16xf32>
    %16 = vector.shape_cast %15 : vector<16xf32> to vector<16x1xf32>
    %17 = arith.maximumf %14, %16 : vector<16x1xf32>
    %18 = arith.subf %14, %17 : vector<16x1xf32>
    %19 = math.exp %18 : vector<16x1xf32>
    %20 = vector.broadcast %17 : vector<16x1xf32> to vector<16x128xf32>
    %21 = arith.subf %13, %20 : vector<16x128xf32>
    %22 = math.exp %21 : vector<16x128xf32>
    %c0_14 = arith.constant 0 : index
    %c0_15 = arith.constant 0 : index
    %23 = vector.load %arg9[%c0_14, %c0_15] : memref<16x1xf32, #tpu.memory_space<vmem>>, vector<16x1xf32>
    %24 = arith.mulf %19, %23 : vector<16x1xf32>
    %cst_16 = arith.constant dense<0.000000e+00> : vector<16xf32>
    %25 = vector.multi_reduction <add>, %22, %cst_16 [1] : vector<16x128xf32> to vector<16xf32>
    %26 = vector.shape_cast %25 : vector<16xf32> to vector<16x1xf32>
    %27 = arith.addf %24, %26 : vector<16x1xf32>
    %c0_17 = arith.constant 0 : index
    %c0_18 = arith.constant 0 : index
    %28 = vector.load %arg9[%c0_17, %c0_18] : memref<16x1xf32, #tpu.memory_space<vmem>>, vector<16x1xf32>
    tpu.vector_store %arg9[%c0_17, %c0_18], %27 {strides = array<i32>} : memref<16x1xf32, #tpu.memory_space<vmem>>, vector<16x1xf32>,
    %c0_19 = arith.constant 0 : index
    %c0_20 = arith.constant 0 : index
    %29 = vector.load %arg10[%c0_19, %c0_20] : memref<16x1xf32, #tpu.memory_space<vmem>>, vector<16x1xf32>
    %30 = arith.mulf %19, %29 : vector<16x1xf32>
    %31 = arith.mulf %22, %13 : vector<16x128xf32>
    %cst_21 = arith.constant dense<0.000000e+00> : vector<16xf32>
    %32 = vector.multi_reduction <add>, %31, %cst_21 [1] : vector<16x128xf32> to vector<16xf32>
    %33 = vector.shape_cast %32 : vector<16xf32> to vector<16x1xf32>
    %34 = arith.addf %30, %33 : vector<16x1xf32>
    %c0_22 = arith.constant 0 : index
    %c0_23 = arith.constant 0 : index
    %35 = vector.load %arg10[%c0_22, %c0_23] : memref<16x1xf32, #tpu.memory_space<vmem>>, vector<16x1xf32>
    tpu.vector_store %arg10[%c0_22, %c0_23], %34 {strides = array<i32>} : memref<16x1xf32, #tpu.memory_space<vmem>>, vector<16x1xf32>,
    %c0_24 = arith.constant 0 : index
    %c0_25 = arith.constant 0 : index
    %36 = vector.load %arg11[%c0_24, %c0_25] : memref<16x1xf32, #tpu.memory_space<vmem>>, vector<16x1xf32>
    %37 = arith.mulf %19, %36 : vector<16x1xf32>
    %38 = arith.mulf %22, %8 : vector<16x128xf32>
    %cst_26 = arith.constant dense<0.000000e+00> : vector<16xf32>
    %39 = vector.multi_reduction <add>, %38, %cst_26 [1] : vector<16x128xf32> to vector<16xf32>
    %40 = vector.shape_cast %39 : vector<16xf32> to vector<16x1xf32>
    %41 = arith.addf %37, %40 : vector<16x1xf32>
    %c0_27 = arith.constant 0 : index
    %c0_28 = arith.constant 0 : index
    %42 = vector.load %arg11[%c0_27, %c0_28] : memref<16x1xf32, #tpu.memory_space<vmem>>, vector<16x1xf32>
    tpu.vector_store %arg11[%c0_27, %c0_28], %41 {strides = array<i32>} : memref<16x1xf32, #tpu.memory_space<vmem>>, vector<16x1xf32>,
    %c0_29 = arith.constant 0 : index
    %c0_30 = arith.constant 0 : index
    %43 = vector.load %arg8[%c0_29, %c0_30] : memref<16x1xf32, #tpu.memory_space<vmem>>, vector<16x1xf32>
    tpu.vector_store %arg8[%c0_29, %c0_30], %17 {strides = array<i32>} : memref<16x1xf32, #tpu.memory_space<vmem>>, vector<16x1xf32>,
    %c0_31 = arith.constant 0 : index
    %c0_32 = arith.constant 0 : index
    %44 = vector.load %arg12[%c0_31, %c0_32] : memref<16x1xf32, #tpu.memory_space<vmem>>, vector<16x1xf32>
    %cst_33 = arith.constant dense<0xFF800000> : vector<16xf32>
    %45 = vector.multi_reduction <maximumf>, %8, %cst_33 [1] : vector<16x128xf32> to vector<16xf32>
    %46 = vector.shape_cast %45 : vector<16xf32> to vector<16x1xf32>
    %47 = arith.maximumf %44, %46 : vector<16x1xf32>
    %48 = arith.subf %44, %47 : vector<16x1xf32>
    %49 = math.exp %48 : vector<16x1xf32>
    %c0_34 = arith.constant 0 : index
    %c0_35 = arith.constant 0 : index
    %50 = vector.load %arg13[%c0_34, %c0_35] : memref<16x1xf32, #tpu.memory_space<vmem>>, vector<16x1xf32>
    %51 = arith.mulf %49, %50 : vector<16x1xf32>
    %52 = vector.broadcast %47 : vector<16x1xf32> to vector<16x128xf32>
    %53 = arith.subf %8, %52 : vector<16x128xf32>
    %54 = math.exp %53 : vector<16x128xf32>
    %cst_36 = arith.constant dense<0.000000e+00> : vector<16xf32>
    %55 = vector.multi_reduction <add>, %54, %cst_36 [1] : vector<16x128xf32> to vector<16xf32>
    %56 = vector.shape_cast %55 : vector<16xf32> to vector<16x1xf32>
    %57 = arith.addf %51, %56 : vector<16x1xf32>
    %c0_37 = arith.constant 0 : index
    %c0_38 = arith.constant 0 : index
    %58 = vector.load %arg13[%c0_37, %c0_38] : memref<16x1xf32, #tpu.memory_space<vmem>>, vector<16x1xf32>
    tpu.vector_store %arg13[%c0_37, %c0_38], %57 {strides = array<i32>} : memref<16x1xf32, #tpu.memory_space<vmem>>, vector<16x1xf32>,
    %c0_39 = arith.constant 0 : index
    %c0_40 = arith.constant 0 : index
    %59 = vector.load %arg12[%c0_39, %c0_40] : memref<16x1xf32, #tpu.memory_space<vmem>>, vector<16x1xf32>
    tpu.vector_store %arg12[%c0_39, %c0_40], %47 {strides = array<i32>} : memref<16x1xf32, #tpu.memory_space<vmem>>, vector<16x1xf32>,
    %c0_i32_41 = arith.constant 0 : i32
    %60 = arith.cmpi eq, %arg1, %c0_i32_41 : i32
    %61 = arith.extui %60 : i1 to i32
    %c0_i32_42 = arith.constant 0 : i32
    %62 = arith.cmpi ne, %61, %c0_i32_42 : i32
    scf.if %62 {
      %c0_43 = arith.constant 0 : index
      %c0_44 = arith.constant 0 : index
      %63 = vector.load %arg10[%c0_43, %c0_44] : memref<16x1xf32, #tpu.memory_space<vmem>>, vector<16x1xf32>
      %c0_45 = arith.constant 0 : index
      %c0_46 = arith.constant 0 : index
      %64 = vector.load %arg11[%c0_45, %c0_46] : memref<16x1xf32, #tpu.memory_space<vmem>>, vector<16x1xf32>
      %65 = arith.subf %63, %64 : vector<16x1xf32>
      %c0_47 = arith.constant 0 : index
      %c0_48 = arith.constant 0 : index
      %66 = vector.load %arg9[%c0_47, %c0_48] : memref<16x1xf32, #tpu.memory_space<vmem>>, vector<16x1xf32>
      %67 = arith.divf %65, %66 : vector<16x1xf32>
      %c0_49 = arith.constant 0 : index
      %c0_50 = arith.constant 0 : index
      %68 = vector.load %arg8[%c0_49, %c0_50] : memref<16x1xf32, #tpu.memory_space<vmem>>, vector<16x1xf32>
      %69 = arith.subf %67, %68 : vector<16x1xf32>
      %c0_51 = arith.constant 0 : index
      %c0_52 = arith.constant 0 : index
      %70 = vector.load %arg12[%c0_51, %c0_52] : memref<16x1xf32, #tpu.memory_space<vmem>>, vector<16x1xf32>
      %71 = arith.addf %69, %70 : vector<16x1xf32>
      %c0_53 = arith.constant 0 : index
      %c0_54 = arith.constant 0 : index
      %72 = vector.load %arg9[%c0_53, %c0_54] : memref<16x1xf32, #tpu.memory_space<vmem>>, vector<16x1xf32>
      %73 = math.log %72 : vector<16x1xf32>
      %74 = arith.subf %71, %73 : vector<16x1xf32>
      %c0_55 = arith.constant 0 : index
      %c0_56 = arith.constant 0 : index
      %75 = vector.load %arg13[%c0_55, %c0_56] : memref<16x1xf32, #tpu.memory_space<vmem>>, vector<16x1xf32>
      %76 = math.log %75 : vector<16x1xf32>
      %77 = arith.addf %74, %76 : vector<16x1xf32>
      %78 = vector.shape_cast %77 : vector<16x1xf32> to vector<1x16x1xf32>
      %cst_57 = arith.constant dense<0.000000e+00> : vector<1xf32>
      %79 = vector.multi_reduction <add>, %78, %cst_57 [1, 2] : vector<1x16x1xf32> to vector<1xf32>
      %80 = vector.shape_cast %79 : vector<1xf32> to vector<1x1x1xf32>
      %81 = vector.extract %80[0, 0, 0] : f32 from vector<1x1x1xf32>
      %82 = vector.broadcast %81 : f32 to vector<1x8x128xf32>
      %c0_58 = arith.constant 0 : index
      %c0_59 = arith.constant 0 : index
      %c0_60 = arith.constant 0 : index
      %83 = vector.load %arg7[%c0_58, %c0_59, %c0_60] : memref<1x8x128xf32, #tpu.memory_space<vmem>>, vector<1x8x128xf32>
      tpu.vector_store %arg7[%c0_58, %c0_59, %c0_60], %82 {strides = array<i32>} : memref<1x8x128xf32, #tpu.memory_space<vmem>>, vector<1x8x128xf32>,
    } else {
    }
    return
  }
  func.func @transform_0(%arg0: i32, %arg1: i32) -> (i32, i32) {
    %c0_i32 = arith.constant 0 : i32
    %c0_i32_0 = arith.constant 0 : i32
    return %arg0, %c0_i32 : i32, i32
  }
  func.func @transform_1(%arg0: i32, %arg1: i32) -> (i32, i32) {
    %c0_i32 = arith.constant 0 : i32
    %c0_i32_0 = arith.constant 0 : i32
    return %c0_i32, %arg1 : i32, i32
  }
  func.func @transform_2(%arg0: i32, %arg1: i32) -> (i32, i32) {
    %c0_i32 = arith.constant 0 : i32
    %c0_i32_0 = arith.constant 0 : i32
    return %arg0, %c0_i32 : i32, i32
  }
  func.func @transform_3(%arg0: i32, %arg1: i32) -> (i32, i32) {
    %c0_i32 = arith.constant 0 : i32
    %c0_i32_0 = arith.constant 0 : i32
    return %c0_i32, %arg1 : i32, i32
  }
  func.func @transform_4(%arg0: i32, %arg1: i32) -> (i32, i32) {
    %c0_i32 = arith.constant 0 : i32
    %c0_i32_0 = arith.constant 0 : i32
    return %c0_i32, %arg1 : i32, i32
  }
  func.func @transform_5(%arg0: i32, %arg1: i32) -> (i32, i32, i32) {
    %c0_i32 = arith.constant 0 : i32
    %c0_i32_0 = arith.constant 0 : i32
    %c0_i32_1 = arith.constant 0 : i32
    return %arg0, %c0_i32, %c0_i32_0 : i32, i32, i32
  }
}

</mosaic_0001>

<llo_original>
// kernel: tpu_custom_call.1
$region0: #{tpu_custom_call.1}
  #allocation0 [shape = 'u32[]', space=smem, size = 0x4, offset = 0x4, fixed_abs, tag = 'smem constant byte address 0x4 - core index']
  #allocation1 [shape = 'u32[144,128]{1,0:T(1,128)}', space=vmem, size = 0x12000, scoped, tag = 'internal scratch']
  #allocation2 [shape = 'f32[16,1]{1,0:T(8,128)}', space=vmem, size = 0x2000, scoped, tag = 'scratch operand']
  #allocation3 [shape = 'f32[16,1]{1,0:T(8,128)}', space=vmem, size = 0x2000, scoped, tag = 'scratch operand']
  #allocation4 [shape = 'f32[16,1]{1,0:T(8,128)}', space=vmem, size = 0x2000, scoped, tag = 'scratch operand']
  #allocation5 [shape = 'f32[16,1]{1,0:T(8,128)}', space=vmem, size = 0x2000, scoped, tag = 'scratch operand']
  #allocation6 [shape = 'f32[16,1]{1,0:T(8,128)}', space=vmem, size = 0x2000, scoped, tag = 'scratch operand']
  #allocation7 [shape = 'f32[16,1]{1,0:T(8,128)}', space=vmem, size = 0x2000, scoped, tag = 'scratch operand']
  %s0 = inlined_call_operand.hbm [shape: bf16[16,32], index: 0, kind: input, shape index: {}]
  %s1 = inlined_call_operand.hbm [shape: bf16[32,128], index: 1, kind: input, shape index: {}]
  %s2 = inlined_call_operand.hbm [shape: bf16[16,32], index: 2, kind: input, shape index: {}]
  %s3 = inlined_call_operand.hbm [shape: bf16[32,128], index: 3, kind: input, shape index: {}]
  %s4 = inlined_call_operand.vmem [shape: f32[1,128], index: 4, kind: input, shape index: {}]
  %s5 = inlined_call_operand.hbm [shape: f32[1,8,128], index: 5, kind: output, shape index: {}]
  %s6 = sld [smem:[#allocation0]]
  $region54: #{tpu_custom_call.1} parent=0
    _
  %s8 = ssub.s32 1, %s6
  %s9 = scalar_select 0, %s8, %s6
  $region1: #{tpu_custom_call.1} parent=0
    #allocation8 [shape = 'u8[4096]{0}', space=vmem, size = 0x1000, scoped, tag = 'input window, operand 0, single buffered']
    #allocation9 [shape = 's32[1]{0}', space=sflag, size = 0x4, scoped, tag = 'scoped memory for tpu_custom_call.1']
    #allocation10 [shape = 's32[1]{0}', space=sflag, size = 0x4, scoped, tag = 'scoped memory for tpu_custom_call.1']
    #allocation11 [shape = 'u8[8192]{0}', space=vmem, size = 0x2000, scoped, tag = 'input window, operand 1, single buffered']
    #allocation12 [shape = 's32[1]{0}', space=sflag, size = 0x4, scoped, tag = 'scoped memory for tpu_custom_call.1']
    #allocation13 [shape = 'u8[4096]{0}', space=vmem, size = 0x1000, scoped, tag = 'input window, operand 2, single buffered']
    #allocation14 [shape = 'u8[8192]{0}', space=vmem, size = 0x2000, scoped, tag = 'input window, operand 3, single buffered']
    #allocation15 [shape = 's32[1]{0}', space=sflag, size = 0x4, scoped, tag = 'scoped memory for tpu_custom_call.1']
    #allocation16 [shape = 'u8[4096]{0}', space=vmem, size = 0x1000, scoped, tag = 'output window, operand 0, single buffered']
    %10 = vsyncpa [#allocation9], 0
    %11 = vsyncpa [#allocation12], 0
    %12 = vsyncpa [#allocation15], 0
    %13 = vsyncpa [#allocation10], 0
    // Predicated region
    $region2: #{tpu_custom_call.1} parent=1 // pred_check
      _
    $region3: #{tpu_custom_call.1} parent=1 // pred_check_branch
      %15 = sbr.rel (0) target = $region5
    $region4: #{tpu_custom_call.1} parent=1 // pred_region
      %s17 = ssub.s32 128, 128
      %18 = vsyncadd [#allocation9], %s17
      %s19 = sshll.u32 [#allocation8], 4
      %s20 = int_to_ptr.vmem [resolvable:$true] %s19
      %25 = dma.hbm_to_vmem [thread:$0]  %s0, 128, %s20, [#allocation9], 64, 64, 4
    $region5: #{tpu_custom_call.1} parent=1 // pred_fallthru
      _
    // Predicated region
    $region6: #{tpu_custom_call.1} parent=1 // pred_check
      _
    $region7: #{tpu_custom_call.1} parent=1 // pred_check_branch
      %27 = sbr.rel (0) target = $region9
    $region8: #{tpu_custom_call.1} parent=1 // pred_region
      %s29 = ssub.s32 256, 256
      %30 = vsyncadd [#allocation12], %s29
      %s31 = sshll.u32 [#allocation11], 4
      %s32 = int_to_ptr.vmem [resolvable:$true] %s31
      %37 = dma.hbm_to_vmem [thread:$0]  %s1, 256, %s32, [#allocation12], 64, 64, 4
    $region9: #{tpu_custom_call.1} parent=1 // pred_fallthru
      _
    // Predicated region
    $region10: #{tpu_custom_call.1} parent=1 // pred_check
      _
    $region11: #{tpu_custom_call.1} parent=1 // pred_check_branch
      %39 = sbr.rel (0) target = $region13
    $region12: #{tpu_custom_call.1} parent=1 // pred_region
      %s41 = ssub.s32 128, 128
      %42 = vsyncadd [#allocation12], %s41
      %s43 = sshll.u32 [#allocation13], 4
      %s44 = int_to_ptr.vmem [resolvable:$true] %s43
      %49 = dma.hbm_to_vmem [thread:$0]  %s2, 128, %s44, [#allocation12], 64, 64, 4
    $region13: #{tpu_custom_call.1} parent=1 // pred_fallthru
      _
    // Predicated region
    $region14: #{tpu_custom_call.1} parent=1 // pred_check
      _
    $region15: #{tpu_custom_call.1} parent=1 // pred_check_branch
      %51 = sbr.rel (0) target = $region17
    $region16: #{tpu_custom_call.1} parent=1 // pred_region
      %s53 = ssub.s32 256, 256
      %54 = vsyncadd [#allocation15], %s53
      %s55 = sshll.u32 [#allocation14], 4
      %s56 = int_to_ptr.vmem [resolvable:$true] %s55
      %61 = dma.hbm_to_vmem [thread:$0]  %s3, 256, %s56, [#allocation15], 64, 64, 4
    $region17: #{tpu_custom_call.1} parent=1 // pred_fallthru
      _
    // Predicated region
    $region18: #{tpu_custom_call.1} parent=1 // pred_check
      _
    $region19: #{tpu_custom_call.1} parent=1 // pred_check_branch
      %63 = sbr.rel (0) target = $region21
    $region20: #{tpu_custom_call.1} parent=1 // pred_region
      _
    $region21: #{tpu_custom_call.1} parent=1 // pred_fallthru
      _
    // Predicated region
    $region22: #{tpu_custom_call.1} parent=1 // pred_check
      _
    $region23: #{tpu_custom_call.1} parent=1 // pred_check_branch
      %65 = sbr.rel (0) target = $region25
    $region24: #{tpu_custom_call.1} parent=1 // pred_region
      %66 = dma.done [#allocation9], 128
    $region25: #{tpu_custom_call.1} parent=1 // pred_fallthru
      _
    // Predicated region
    $region26: #{tpu_custom_call.1} parent=1 // pred_check
      _
    $region27: #{tpu_custom_call.1} parent=1 // pred_check_branch
      %68 = sbr.rel (0) target = $region29
    $region28: #{tpu_custom_call.1} parent=1 // pred_region
      %69 = dma.done [#allocation12], 256
    $region29: #{tpu_custom_call.1} parent=1 // pred_fallthru
      _
    // Predicated region
    $region30: #{tpu_custom_call.1} parent=1 // pred_check
      _
    $region31: #{tpu_custom_call.1} parent=1 // pred_check_branch
      %71 = sbr.rel (0) target = $region33
    $region32: #{tpu_custom_call.1} parent=1 // pred_region
      %72 = dma.done [#allocation12], 128
    $region33: #{tpu_custom_call.1} parent=1 // pred_fallthru
      _
    // Predicated region
    $region34: #{tpu_custom_call.1} parent=1 // pred_check
      _
    $region35: #{tpu_custom_call.1} parent=1 // pred_check_branch
      %74 = sbr.rel (0) target = $region37
    $region36: #{tpu_custom_call.1} parent=1 // pred_region
      %75 = dma.done [#allocation15], 256
    $region37: #{tpu_custom_call.1} parent=1 // pred_fallthru
      _
    %p77 = scmp.eq.s32.totalorder 0, 0
    // Predicated region
    $region38: #{tpu_custom_call.1} parent=1 // pred_check
      %p78 = pneg %p77
    $region39: #{tpu_custom_call.1} parent=1 // pred_check_branch
      %80 = sbr.rel (%p78) target = $region41
    $region40: #{tpu_custom_call.1} parent=1 // pred_region
      %vm81 = vcmask 7168
      %82 = vst.msk [vmem:[#allocation2] sm:$0xff] %vm81, -inf
      %83 = vst.msk [vmem:[#allocation2 + $0x8] sm:$0xff] %vm81, -inf
      %84 = vst.msk [vmem:[#allocation6] sm:$0xff] %vm81, -inf
      %85 = vst.msk [vmem:[#allocation6 + $0x8] sm:$0xff] %vm81, -inf
      %86 = vst.msk [vmem:[#allocation3] sm:$0xff] %vm81, 0.0
      %87 = vst.msk [vmem:[#allocation3 + $0x8] sm:$0xff] %vm81, 0.0
      %88 = vst.msk [vmem:[#allocation7] sm:$0xff] %vm81, 0.0
      %89 = vst.msk [vmem:[#allocation7 + $0x8] sm:$0xff] %vm81, 0.0
      %90 = vst.msk [vmem:[#allocation4] sm:$0xff] %vm81, 0.0
      %91 = vst.msk [vmem:[#allocation4 + $0x8] sm:$0xff] %vm81, 0.0
      %92 = vst.msk [vmem:[#allocation5] sm:$0xff] %vm81, 0.0
      %93 = vst.msk [vmem:[#allocation5 + $0x8] sm:$0xff] %vm81, 0.0
    $region41: #{tpu_custom_call.1} parent=1 // pred_fallthru
      _
    %v94 = vld [vmem:[%s4] sm:$0x1]
    %v95 = vld [vmem:[#allocation8] sm:$0xf]
    %v96 = vld [vmem:[#allocation8 + $0x4] sm:$0xf]
    %v97 = vld [vmem:[#allocation11] sm:$0xf]
    %v98 = vld [vmem:[#allocation11 + $0x4] sm:$0xf]
    %v99 = vld [vmem:[#allocation11 + $0x8] sm:$0xf]
    %v100 = vld [vmem:[#allocation11 + $0xc] sm:$0xf]
    %v102 = vlaneseq
    %v103 = vshrl.u32 %v102, 7
    %v104 = vsub.s32 0, %v103
    %v105 = vrot.slane %v94, %v104
    %v109 = vunpack.c.l.b16 %v95
    %v110 = vunpack.c.l.b16 %v96
    %v111 = vpack.c.b16 %v110, %v109
    %v116 = vunpack.c.l.b16 %v97
    %v117 = vunpack.c.l.b16 %v98
    %v118 = vunpack.c.l.b16 %v99
    %v119 = vunpack.c.l.b16 %v100
    %v120 = vpack.c.b16 %v117, %v116
    %v121 = vpack.c.b16 %v119, %v118
    %vm124 = vcmask 261120
    %v126 = vsel %vm124, %v111, 0
    %128 = vmatprep.subr.bf16.mxu0 0
    %129 = vmatpush1.bf16.msra.mxu0 %v120
    %130 = vmatprep.subr.bf16.mxu0 0
    %131 = vmatpush1.bf16.msra.mxu0 %v121
    %132 = vmatprep.subr.bf16.mxu0 0
    %133 = vmatpush1.bf16.msra.mxu0 0
    %134 = vmatprep.subr.bf16.mxu0 0
    %135 = vmatpush1.bf16.msra.mxu0 0
    %136 = vmatprep.subr.bf16.mxu0 0
    %137 = vmatpush1.bf16.msra.mxu0 0
    %138 = vmatprep.subr.bf16.mxu0 0
    %139 = vmatpush1.bf16.msra.mxu0 0
    %140 = vmatprep.subr.bf16.mxu0 0
    %141 = vmatpush1.bf16.msra.mxu0 0
    %142 = vmatprep.subr.bf16.mxu0 0
    %143 = vmatpush1.bf16.msra.mxu0 0
    %144 = vmatprep.subr.bf16.mxu0 0
    %145 = vmatpush1.bf16.msra.mxu0 0
    %146 = vmatprep.subr.bf16.mxu0 0
    %147 = vmatpush1.bf16.msra.mxu0 0
    %148 = vmatprep.subr.bf16.mxu0 0
    %149 = vmatpush1.bf16.msra.mxu0 0
    %150 = vmatprep.subr.bf16.mxu0 0
    %151 = vmatpush1.bf16.msra.mxu0 0
    %152 = vmatprep.subr.bf16.mxu0 0
    %153 = vmatpush1.bf16.msra.mxu0 0
    %154 = vmatprep.subr.bf16.mxu0 0
    %155 = vmatpush1.bf16.msra.mxu0 0
    %156 = vmatprep.subr.bf16.mxu0 0
    %157 = vmatpush1.bf16.msra.mxu0 0
    %158 = vmatprep.subr.bf16.mxu0 0
    %159 = vmatpush1.bf16.msra.mxu0 0
    %160 = vmatprep.mubr.bf16.mxu0 0
    %161 = vmatmul.mubr.bf16.gmra.mrb[0].mxu0 %v126
    %v162 = vpop.f32.mrb[0].mxu0
    %v163 = vadd.f32 %v105, %v162
    %v164 = vpop.f32.mrb[0].mxu0
    %v165 = vpop.f32.mrb[0].mxu0
    %v166 = vadd.f32 %v105, %v165
    %v167 = vpop.f32.mrb[0].mxu0
    %168 = vdwg.mxu0
    %v169 = vld [vmem:[#allocation13] sm:$0xf]
    %v170 = vld [vmem:[#allocation13 + $0x4] sm:$0xf]
    %v171 = vld [vmem:[#allocation14] sm:$0xf]
    %v172 = vld [vmem:[#allocation14 + $0x4] sm:$0xf]
    %v173 = vld [vmem:[#allocation14 + $0x8] sm:$0xf]
    %v174 = vld [vmem:[#allocation14 + $0xc] sm:$0xf]
    %v177 = vunpack.c.l.b16 %v169
    %v178 = vunpack.c.l.b16 %v170
    %v179 = vpack.c.b16 %v178, %v177
    %v184 = vunpack.c.l.b16 %v171
    %v185 = vunpack.c.l.b16 %v172
    %v186 = vunpack.c.l.b16 %v173
    %v187 = vunpack.c.l.b16 %v174
    %v188 = vpack.c.b16 %v185, %v184
    %v189 = vpack.c.b16 %v187, %v186
    %v193 = vsel %vm124, %v179, 0
    %195 = vmatprep.subr.bf16.mxu0 0
    %196 = vmatpush1.bf16.msra.mxu0 %v188
    %197 = vmatprep.subr.bf16.mxu0 0
    %198 = vmatpush1.bf16.msra.mxu0 %v189
    %199 = vmatprep.subr.bf16.mxu0 0
    %200 = vmatpush1.bf16.msra.mxu0 0
    %201 = vmatprep.subr.bf16.mxu0 0
    %202 = vmatpush1.bf16.msra.mxu0 0
    %203 = vmatprep.subr.bf16.mxu0 0
    %204 = vmatpush1.bf16.msra.mxu0 0
    %205 = vmatprep.subr.bf16.mxu0 0
    %206 = vmatpush1.bf16.msra.mxu0 0
    %207 = vmatprep.subr.bf16.mxu0 0
    %208 = vmatpush1.bf16.msra.mxu0 0
    %209 = vmatprep.subr.bf16.mxu0 0
    %210 = vmatpush1.bf16.msra.mxu0 0
    %211 = vmatprep.subr.bf16.mxu0 0
    %212 = vmatpush1.bf16.msra.mxu0 0
    %213 = vmatprep.subr.bf16.mxu0 0
    %214 = vmatpush1.bf16.msra.mxu0 0
    %215 = vmatprep.subr.bf16.mxu0 0
    %216 = vmatpush1.bf16.msra.mxu0 0
    %217 = vmatprep.subr.bf16.mxu0 0
    %218 = vmatpush1.bf16.msra.mxu0 0
    %219 = vmatprep.subr.bf16.mxu0 0
    %220 = vmatpush1.bf16.msra.mxu0 0
    %221 = vmatprep.subr.bf16.mxu0 0
    %222 = vmatpush1.bf16.msra.mxu0 0
    %223 = vmatprep.subr.bf16.mxu0 0
    %224 = vmatpush1.bf16.msra.mxu0 0
    %225 = vmatprep.subr.bf16.mxu0 0
    %226 = vmatpush1.bf16.msra.mxu0 0
    %227 = vmatprep.mubr.bf16.mxu0 0
    %228 = vmatmul.mubr.bf16.gmra.mrb[0].mxu0 %v193
    %v229 = vpop.f32.mrb[0].mxu0
    %v230 = vadd.f32 %v105, %v229
    %v231 = vpop.f32.mrb[0].mxu0
    %v232 = vpop.f32.mrb[0].mxu0
    %v233 = vadd.f32 %v105, %v232
    %v234 = vpop.f32.mrb[0].mxu0
    %235 = vdwg.mxu0
    %v236 = vld [vmem:[#allocation2] sm:$0xff]
    %v237 = vld [vmem:[#allocation2 + $0x8] sm:$0xff]
    %238 = vmax.xlane.f32.xlu0 %v230
    %v239 = vpop.xlane.xlu0 %238
    %240 = vmax.xlane.f32.xlu0 %v233
    %v241 = vpop.xlane.xlu0 %240
    %v242 = vmax.f32 %v236, %v239
    %v243 = vmax.f32 %v237, %v241
    %v244 = vsub.f32 %v236, %v242
    %v245 = vsub.f32 %v237, %v243
    %v246 = vmul.f32 %v244, 1.442695
    %v247 = vpow.pop %v246
    %v248 = vmul.f32 %v245, 1.442695
    %v249 = vpow.pop %v248
    %251 = vset.pattern.permute.xlu0 0
    %252 = vperm.xlu0 %251, %v242
    %v253 = vpop.permute.xlu0 %252
    %256 = vset.pattern.permute.xlu0 0
    %257 = vperm.xlu0 %256, %v243
    %v258 = vpop.permute.xlu0 %257
    %v260 = vsub.f32 %v230, %v253
    %v261 = vsub.f32 %v233, %v258
    %v262 = vmul.f32 %v260, 1.442695
    %v263 = vpow.pop %v262
    %v264 = vmul.f32 %v261, 1.442695
    %v265 = vpow.pop %v264
    %v266 = vld [vmem:[#allocation3] sm:$0xff]
    %v267 = vld [vmem:[#allocation3 + $0x8] sm:$0xff]
    %v268 = vmul.f32 %v247, %v266
    %v269 = vmul.f32 %v249, %v267
    %270 = vadd.xlane.f32.xlu0 %v263
    %v271 = vpop.xlane.xlu0 %270
    %272 = vadd.xlane.f32.xlu0 %v265
    %v273 = vpop.xlane.xlu0 %272
    %v274 = vadd.f32 %v268, %v271
    %v275 = vadd.f32 %v269, %v273
    %vm276 = vcmask 7168
    %277 = vst.msk [vmem:[#allocation3] sm:$0xff] %vm276, %v274
    %278 = vst.msk [vmem:[#allocation3 + $0x8] sm:$0xff] %vm276, %v275
    %v279 = vld [vmem:[#allocation4] sm:$0xff]
    %v280 = vld [vmem:[#allocation4 + $0x8] sm:$0xff]
    %v281 = vmul.f32 %v247, %v279
    %v282 = vmul.f32 %v249, %v280
    %v283 = vmul.f32 %v263, %v230
    %v284 = vmul.f32 %v265, %v233
    %285 = vadd.xlane.f32.xlu0 %v283
    %v286 = vpop.xlane.xlu0 %285
    %287 = vadd.xlane.f32.xlu0 %v284
    %v288 = vpop.xlane.xlu0 %287
    %v289 = vadd.f32 %v281, %v286
    %v290 = vadd.f32 %v282, %v288
    %291 = vst.msk [vmem:[#allocation4] sm:$0xff] %vm276, %v289
    %292 = vst.msk [vmem:[#allocation4 + $0x8] sm:$0xff] %vm276, %v290
    %v293 = vld [vmem:[#allocation5] sm:$0xff]
    %v294 = vld [vmem:[#allocation5 + $0x8] sm:$0xff]
    %v295 = vmul.f32 %v247, %v293
    %v296 = vmul.f32 %v249, %v294
    %v297 = vmul.f32 %v263, %v163
    %v298 = vmul.f32 %v265, %v166
    %299 = vadd.xlane.f32.xlu0 %v297
    %v300 = vpop.xlane.xlu0 %299
    %301 = vadd.xlane.f32.xlu0 %v298
    %v302 = vpop.xlane.xlu0 %301
    %v303 = vadd.f32 %v295, %v300
    %v304 = vadd.f32 %v296, %v302
    %305 = vst.msk [vmem:[#allocation5] sm:$0xff] %vm276, %v303
    %306 = vst.msk [vmem:[#allocation5 + $0x8] sm:$0xff] %vm276, %v304
    %307 = vst.msk [vmem:[#allocation2] sm:$0xff] %vm276, %v242
    %308 = vst.msk [vmem:[#allocation2 + $0x8] sm:$0xff] %vm276, %v243
    %v309 = vld [vmem:[#allocation6] sm:$0xff]
    %v310 = vld [vmem:[#allocation6 + $0x8] sm:$0xff]
    %311 = vmax.xlane.f32.xlu0 %v163
    %v312 = vpop.xlane.xlu0 %311
    %313 = vmax.xlane.f32.xlu0 %v166
    %v314 = vpop.xlane.xlu0 %313
    %v315 = vmax.f32 %v309, %v312
    %v316 = vmax.f32 %v310, %v314
    %v317 = vsub.f32 %v309, %v315
    %v318 = vsub.f32 %v310, %v316
    %v319 = vmul.f32 %v317, 1.442695
    %v320 = vpow.pop %v319
    %v321 = vmul.f32 %v318, 1.442695
    %v322 = vpow.pop %v321
    %v323 = vld [vmem:[#allocation7] sm:$0xff]
    %v324 = vld [vmem:[#allocation7 + $0x8] sm:$0xff]
    %v325 = vmul.f32 %v320, %v323
    %v326 = vmul.f32 %v322, %v324
    %328 = vset.pattern.permute.xlu0 0
    %329 = vperm.xlu0 %328, %v315
    %v330 = vpop.permute.xlu0 %329
    %333 = vset.pattern.permute.xlu0 0
    %334 = vperm.xlu0 %333, %v316
    %v335 = vpop.permute.xlu0 %334
    %v337 = vsub.f32 %v163, %v330
    %v338 = vsub.f32 %v166, %v335
    %v339 = vmul.f32 %v337, 1.442695
    %v340 = vpow.pop %v339
    %v341 = vmul.f32 %v338, 1.442695
    %v342 = vpow.pop %v341
    %343 = vadd.xlane.f32.xlu0 %v340
    %v344 = vpop.xlane.xlu0 %343
    %345 = vadd.xlane.f32.xlu0 %v342
    %v346 = vpop.xlane.xlu0 %345
    %v347 = vadd.f32 %v325, %v344
    %v348 = vadd.f32 %v326, %v346
    %349 = vst.msk [vmem:[#allocation7] sm:$0xff] %vm276, %v347
    %350 = vst.msk [vmem:[#allocation7 + $0x8] sm:$0xff] %vm276, %v348
    %351 = vst.msk [vmem:[#allocation6] sm:$0xff] %vm276, %v315
    %352 = vst.msk [vmem:[#allocation6 + $0x8] sm:$0xff] %vm276, %v316
    // Predicated region
    $region42: #{tpu_custom_call.1} parent=1 // pred_check
      %p353 = pneg %p77
    $region43: #{tpu_custom_call.1} parent=1 // pred_check_branch
      %355 = sbr.rel (%p353) target = $region45
    $region44: #{tpu_custom_call.1} parent=1 // pred_region
      %v356 = vld [vmem:[#allocation4] sm:$0xff]
      %v357 = vld [vmem:[#allocation4 + $0x8] sm:$0xff]
      %v358 = vld [vmem:[#allocation5] sm:$0xff]
      %v359 = vld [vmem:[#allocation5 + $0x8] sm:$0xff]
      %v360 = vsub.f32 %v356, %v358
      %v361 = vsub.f32 %v357, %v359
      %v362 = vld [vmem:[#allocation3] sm:$0xff]
      %v363 = vld [vmem:[#allocation3 + $0x8] sm:$0xff]
      %v364 = vrcp.pop %v362
      %v365 = vmul.f32 %v360, %v364
      %v366 = vrcp.pop %v363
      %v367 = vmul.f32 %v361, %v366
      %v368 = vld [vmem:[#allocation2] sm:$0xff]
      %v369 = vld [vmem:[#allocation2 + $0x8] sm:$0xff]
      %v370 = vsub.f32 %v365, %v368
      %v371 = vsub.f32 %v367, %v369
      %v372 = vld [vmem:[#allocation6] sm:$0xff]
      %v373 = vld [vmem:[#allocation6 + $0x8] sm:$0xff]
      %v374 = vadd.f32 %v370, %v372
      %v375 = vadd.f32 %v371, %v373
      %v376 = vlog2.pop %v362
      %v377 = vmul.f32 %v376, 0.6931472
      %v378 = vlog2.pop %v363
      %v379 = vmul.f32 %v378, 0.6931472
      %v380 = vsub.f32 %v374, %v377
      %v381 = vsub.f32 %v375, %v379
      %v382 = vld [vmem:[#allocation7] sm:$0xff]
      %v383 = vld [vmem:[#allocation7 + $0x8] sm:$0xff]
      %v384 = vlog2.pop %v382
      %v385 = vmul.f32 %v384, 0.6931472
      %v386 = vlog2.pop %v383
      %v387 = vmul.f32 %v386, 0.6931472
      %v388 = vadd.f32 %v380, %v385
      %v389 = vadd.f32 %v381, %v387
      %v390 = vsel %vm276, %v388, 0.0
      %v391 = vsel %vm276, %v389, 0.0
      %v392 = vadd.f32 %v390, %v391
      %393 = vadd.xlane.f32.xlu0 %v392
      %v394 = vpop.xlane.xlu0 %393
      %v395 = vrot.slane %v394, 4
      %v396 = vadd.f32 %v394, %v395
      %v397 = vrot.slane %v396, 2
      %v398 = vadd.f32 %v396, %v397
      %v399 = vrot.slane %v398, 1
      %v400 = vadd.f32 %v398, %v399
      %s401 = vtos %v400
      %v402 = vstv %s401
      %403 = vst [vmem:[#allocation16] sm:$0xff] %v402
    $region45: #{tpu_custom_call.1} parent=1 // pred_fallthru
      _
    // Predicated region
    $region46: #{tpu_custom_call.1} parent=1 // pred_check
      _
    $region47: #{tpu_custom_call.1} parent=1 // pred_check_branch
      %405 = sbr.rel (0) target = $region49
    $region48: #{tpu_custom_call.1} parent=1 // pred_region
      %s407 = ssub.s32 128, 128
      %408 = vsyncadd [#allocation10], %s407
      %s410 = sshll.u32 [#allocation16], 4
      %s411 = int_to_ptr.vmem [resolvable:$true] %s410
      %413 = dma.vmem_to_hbm [thread:$0]  %s411, 128, %s5, [#allocation10]
    $region49: #{tpu_custom_call.1} parent=1 // pred_fallthru
      _
    // Predicated region
    $region50: #{tpu_custom_call.1} parent=1 // pred_check
      _
    $region51: #{tpu_custom_call.1} parent=1 // pred_check_branch
      %415 = sbr.rel (0) target = $region53
    $region52: #{tpu_custom_call.1} parent=1 // pred_region
      %416 = dma.done [#allocation10], 128
    $region53: #{tpu_custom_call.1} parent=1 // pred_fallthru
      _
    %417 = vsyncpa [#allocation9], 1
    %418 = vsyncpa [#allocation12], 1
    %419 = vsyncpa [#allocation15], 1
    %420 = vsyncpa [#allocation10], 1

</llo_original>
